<compile_context>
chip_gen: v7x
topology: tpu7x:2x2x1
jax: 0.10.0
libtpu: 0.0.40
codegen_flags: <defaults>
</compile_context>

<pallas_src>
import functools

import jax
import jax.numpy as jnp
from jax.experimental import pallas as pl
from jax.experimental.pallas import tpu as pltpu

INPUT_SIZE = 28 * 28   # 784
HIDDEN = 128
LATENT = 64


def autoencoder_kernel(x_ref,
                       w1_ref, b1_ref,   # encoder Linear(784, 128)
                       w2_ref, b2_ref,   # encoder Linear(128, 64)
                       w3_ref, b3_ref,   # decoder Linear(64, 128)
                       w4_ref, b4_ref,   # decoder Linear(128, 784)
                       o_ref):
    # bf16 matmul operands, f32 accumulation on the MXU.
    x = x_ref[...].astype(jnp.bfloat16)

    # Encoder: Linear(784,128) -> ReLU -> Linear(128,64) -> ReLU
    h1 = jnp.dot(x, w1_ref[...], preferred_element_type=jnp.float32) + b1_ref[...]
    h1 = jnp.maximum(h1, 0.0).astype(jnp.bfloat16)
    z = jnp.dot(h1, w2_ref[...], preferred_element_type=jnp.float32) + b2_ref[...]
    z = jnp.maximum(z, 0.0).astype(jnp.bfloat16)

    # Decoder: Linear(64,128) -> ReLU -> Linear(128,784) -> Sigmoid
    h2 = jnp.dot(z, w3_ref[...], preferred_element_type=jnp.float32) + b3_ref[...]
    h2 = jnp.maximum(h2, 0.0).astype(jnp.bfloat16)
    y = jnp.dot(h2, w4_ref[...], preferred_element_type=jnp.float32) + b4_ref[...]
    o_ref[...] = jax.nn.sigmoid(y).astype(o_ref.dtype)


def _round_up(n, m):
    return ((n + m - 1) // m) * m


@functools.partial(jax.jit, static_argnames=("tile_b",))
def autoencoder_forward(x_nchw, params, *, tile_b=512):
    """x_nchw: (B, 1, 28, 28) float32 -> reconstructed (B, 784) float32."""
    B = x_nchw.shape[0]
    x = x_nchw.reshape(B, INPUT_SIZE)                               # nn.Flatten()

    w1, b1, w2, b2, w3, b3, w4, b4 = params
    # Weights go to the MXU in bf16 (tiny arrays, cast once); biases stay f32
    # because they are added to the f32 accumulator.
    w1, w2, w3, w4 = (w.astype(jnp.bfloat16) for w in (w1, w2, w3, w4))

    # Clamp the tile for small batches, then zero-pad the batch to a tile
    # multiple; padded rows are sliced off the output.
    tb = min(tile_b, _round_up(B, 8))
    Bp = _round_up(B, tb)
    if Bp != B:
        x = jnp.pad(x, ((0, Bp - B), (0, 0)))
    grid = Bp // tb

    full = lambda shape: pl.BlockSpec(shape, lambda i: (0, 0))

    flops = 2 * Bp * (INPUT_SIZE * HIDDEN + HIDDEN * LATENT
                      + LATENT * HIDDEN + HIDDEN * INPUT_SIZE)
    weight_bytes = 2 * (INPUT_SIZE * HIDDEN * 2 + HIDDEN * LATENT * 2) \
        + 4 * (2 * HIDDEN + LATENT + INPUT_SIZE)
    cost = pl.CostEstimate(flops=flops,
                           transcendentals=Bp * INPUT_SIZE,
                           bytes_accessed=2 * Bp * INPUT_SIZE * 4 + weight_bytes)

    out = pl.pallas_call(
        autoencoder_kernel,
        out_shape=jax.ShapeDtypeStruct((Bp, INPUT_SIZE), jnp.float32),
        grid_spec=pltpu.PrefetchScalarGridSpec(
            num_scalar_prefetch=0,
            grid=(grid,),
            in_specs=[
                pl.BlockSpec((tb, INPUT_SIZE), lambda i: (i, 0)),   # x tile
                full((INPUT_SIZE, HIDDEN)), full((1, HIDDEN)),      # w1, b1
                full((HIDDEN, LATENT)),     full((1, LATENT)),      # w2, b2
                full((LATENT, HIDDEN)),     full((1, HIDDEN)),      # w3, b3
                full((HIDDEN, INPUT_SIZE)), full((1, INPUT_SIZE)),  # w4, b4
            ],
            out_specs=pl.BlockSpec((tb, INPUT_SIZE), lambda i: (i, 0)),
        ),
        compiler_params=pltpu.CompilerParams(
            # Batch axis is embarrassingly parallel -> megacore-shardable.
            dimension_semantics=("parallel",)),
        cost_estimate=cost,
    )(x, w1, b1, w2, b2, w3, b3, w4, b4)

    return out[:B] if Bp != B else out


def init_params(key):
    """Deterministic init mimicking torch.nn.Linear (uniform +/-1/sqrt(fan_in)).

    Weights are stored transposed: shape (in_features, out_features)."""
    def linear(key, fan_in, fan_out):
        kw, kb = jax.random.split(key)
        bound = 1.0 / jnp.sqrt(fan_in)
        w = jax.random.uniform(kw, (fan_in, fan_out), jnp.float32, -bound, bound)
        b = jax.random.uniform(kb, (1, fan_out), jnp.float32, -bound, bound)
        return w, b

    k1, k2, k3, k4 = jax.random.split(key, 4)
    w1, b1 = linear(k1, INPUT_SIZE, HIDDEN)   # encoder Linear(784, 128)
    w2, b2 = linear(k2, HIDDEN, LATENT)       # encoder Linear(128, 64)
    w3, b3 = linear(k3, LATENT, HIDDEN)       # decoder Linear(64, 128)
    w4, b4 = linear(k4, HIDDEN, INPUT_SIZE)   # decoder Linear(128, 784)
    return (w1, b1, w2, b2, w3, b3, w4, b4)


def reference_forward(x_nchw, params):
    """Plain-JAX f32 reference identical to the PyTorch forward pass."""
    w1, b1, w2, b2, w3, b3, w4, b4 = params
    x = x_nchw.reshape(x_nchw.shape[0], -1)
    h = jnp.maximum(x @ w1 + b1, 0.0)
    z = jnp.maximum(h @ w2 + b2, 0.0)
    h = jnp.maximum(z @ w3 + b3, 0.0)
    return jax.nn.sigmoid(h @ w4 + b4)


if __name__ == "__main__":
    key = jax.random.PRNGKey(0)
    kx, kx2, kp = jax.random.split(key, 3)
    params = init_params(kp)

    # Small aligned batch (tile clamps to 8).
    B = 8
    x = jax.random.uniform(kx, (B, 1, 28, 28), jnp.float32)   # NCHW, like MNIST
    out = jax.block_until_ready(autoencoder_forward(x, params))
    ref = reference_forward(x, params)
    assert out.shape == (B, INPUT_SIZE)
    max_err = float(jnp.max(jnp.abs(out - ref)))
    # bf16 matmul operands (f32 accumulation) -> looser tolerance than pure f32.
    assert max_err < 2e-2, f"mismatch vs reference: max abs err {max_err}"

    # Ragged batch exercises the clamp + zero-pad + slice path.
    B2 = 50
    x2 = jax.random.uniform(kx2, (B2, 1, 28, 28), jnp.float32)
    out2 = jax.block_until_ready(autoencoder_forward(x2, params))
    ref2 = reference_forward(x2, params)
    assert out2.shape == (B2, INPUT_SIZE)
    max_err2 = float(jnp.max(jnp.abs(out2 - ref2)))
    assert max_err2 < 2e-2, f"mismatch vs reference (ragged): max abs err {max_err2}"

    print("KERNEL_OK")
</pallas_src>

<mosaic_0001>
module attributes {stable_mosaic.version = 11 : i64} {
  func.func @autoencoder_kernel(%arg0: i32, %arg1: memref<8x784xf32, #tpu.memory_space<vmem>>, %arg2: memref<784x128xbf16, #tpu.memory_space<vmem>>, %arg3: memref<1x128xf32, #tpu.memory_space<vmem>>, %arg4: memref<128x64xbf16, #tpu.memory_space<vmem>>, %arg5: memref<1x64xf32, #tpu.memory_space<vmem>>, %arg6: memref<64x128xbf16, #tpu.memory_space<vmem>>, %arg7: memref<1x128xf32, #tpu.memory_space<vmem>>, %arg8: memref<128x784xbf16, #tpu.memory_space<vmem>>, %arg9: memref<1x784xf32, #tpu.memory_space<vmem>>, %arg10: memref<8x784xf32, #tpu.memory_space<vmem>>) attributes {dimension_semantics = [#tpu.dimension_semantics<parallel>], iteration_bounds = array<i64: 1>, scalar_prefetch = 0 : i64, scratch_operands = 0 : i64, tpu.core_type = #tpu.core_type<tc>, window_params = [{transform_indices = @transform_0, window_bounds = array<i64: 8, 784>}, {pipeline_mode = #tpu.pipeline_mode<synchronous>, transform_indices = @transform_1, window_bounds = array<i64: 784, 128>}, {pipeline_mode = #tpu.pipeline_mode<synchronous>, transform_indices = @transform_2, window_bounds = array<i64: 1, 128>}, {pipeline_mode = #tpu.pipeline_mode<synchronous>, transform_indices = @transform_3, window_bounds = array<i64: 128, 64>}, {pipeline_mode = #tpu.pipeline_mode<synchronous>, transform_indices = @transform_4, window_bounds = array<i64: 1, 64>}, {pipeline_mode = #tpu.pipeline_mode<synchronous>, transform_indices = @transform_5, window_bounds = array<i64: 64, 128>}, {pipeline_mode = #tpu.pipeline_mode<synchronous>, transform_indices = @transform_6, window_bounds = array<i64: 1, 128>}, {pipeline_mode = #tpu.pipeline_mode<synchronous>, transform_indices = @transform_7, window_bounds = array<i64: 128, 784>}, {pipeline_mode = #tpu.pipeline_mode<synchronous>, transform_indices = @transform_8, window_bounds = array<i64: 1, 784>}, {transform_indices = @transform_9, window_bounds = array<i64: 8, 784>}]} {
    %c0 = arith.constant 0 : index
    %c0_0 = arith.constant 0 : index
    %0 = vector.load %arg1[%c0, %c0_0] : memref<8x784xf32, #tpu.memory_space<vmem>>, vector<8x784xf32>
    %1 = arith.truncf %0 : vector<8x784xf32> to vector<8x784xbf16>
    %c0_1 = arith.constant 0 : index
    %c0_2 = arith.constant 0 : index
    %2 = vector.load %arg2[%c0_1, %c0_2] : memref<784x128xbf16, #tpu.memory_space<vmem>>, vector<784x128xbf16>
    %cst = arith.constant dense<0.000000e+00> : vector<8x128xf32>
    %3 = tpu.matmul %1, %2, %cst {dimension_numbers = #tpu.dot_dimension_numbers<[1], [0], [0], [1], [0, 0, 1, 1], [], []>} : vector<8x784xbf16>, vector<784x128xbf16>, vector<8x128xf32> -> vector<8x128xf32>
    %c0_3 = arith.constant 0 : index
    %c0_4 = arith.constant 0 : index
    %4 = vector.load %arg3[%c0_3, %c0_4] : memref<1x128xf32, #tpu.memory_space<vmem>>, vector<1x128xf32>
    %5 = vector.broadcast %4 : vector<1x128xf32> to vector<8x128xf32>
    %6 = arith.addf %3, %5 : vector<8x128xf32>
    %cst_5 = arith.constant 0.000000e+00 : f32
    %7 = vector.broadcast %cst_5 : f32 to vector<8x128xf32>
    %8 = arith.maximumf %6, %7 : vector<8x128xf32>
    %9 = arith.truncf %8 : vector<8x128xf32> to vector<8x128xbf16>
    %c0_6 = arith.constant 0 : index
    %c0_7 = arith.constant 0 : index
    %10 = vector.load %arg4[%c0_6, %c0_7] : memref<128x64xbf16, #tpu.memory_space<vmem>>, vector<128x64xbf16>
    %cst_8 = arith.constant dense<0.000000e+00> : vector<8x64xf32>
    %11 = tpu.matmul %9, %10, %cst_8 {dimension_numbers = #tpu.dot_dimension_numbers<[1], [0], [0], [1], [0, 0, 1, 1], [], []>} : vector<8x128xbf16>, vector<128x64xbf16>, vector<8x64xf32> -> vector<8x64xf32>
    %c0_9 = arith.constant 0 : index
    %c0_10 = arith.constant 0 : index
    %12 = vector.load %arg5[%c0_9, %c0_10] : memref<1x64xf32, #tpu.memory_space<vmem>>, vector<1x64xf32>
    %13 = vector.broadcast %12 : vector<1x64xf32> to vector<8x64xf32>
    %14 = arith.addf %11, %13 : vector<8x64xf32>
    %cst_11 = arith.constant 0.000000e+00 : f32
    %15 = vector.broadcast %cst_11 : f32 to vector<8x64xf32>
    %16 = arith.maximumf %14, %15 : vector<8x64xf32>
    %17 = arith.truncf %16 : vector<8x64xf32> to vector<8x64xbf16>
    %c0_12 = arith.constant 0 : index
    %c0_13 = arith.constant 0 : index
    %18 = vector.load %arg6[%c0_12, %c0_13] : memref<64x128xbf16, #tpu.memory_space<vmem>>, vector<64x128xbf16>
    %cst_14 = arith.constant dense<0.000000e+00> : vector<8x128xf32>
    %19 = tpu.matmul %17, %18, %cst_14 {dimension_numbers = #tpu.dot_dimension_numbers<[1], [0], [0], [1], [0, 0, 1, 1], [], []>} : vector<8x64xbf16>, vector<64x128xbf16>, vector<8x128xf32> -> vector<8x128xf32>
    %c0_15 = arith.constant 0 : index
    %c0_16 = arith.constant 0 : index
    %20 = vector.load %arg7[%c0_15, %c0_16] : memref<1x128xf32, #tpu.memory_space<vmem>>, vector<1x128xf32>
    %21 = vector.broadcast %20 : vector<1x128xf32> to vector<8x128xf32>
    %22 = arith.addf %19, %21 : vector<8x128xf32>
    %cst_17 = arith.constant 0.000000e+00 : f32
    %23 = vector.broadcast %cst_17 : f32 to vector<8x128xf32>
    %24 = arith.maximumf %22, %23 : vector<8x128xf32>
    %25 = arith.truncf %24 : vector<8x128xf32> to vector<8x128xbf16>
    %c0_18 = arith.constant 0 : index
    %c0_19 = arith.constant 0 : index
    %26 = vector.load %arg8[%c0_18, %c0_19] : memref<128x784xbf16, #tpu.memory_space<vmem>>, vector<128x784xbf16>
    %cst_20 = arith.constant dense<0.000000e+00> : vector<8x784xf32>
    %27 = tpu.matmul %25, %26, %cst_20 {dimension_numbers = #tpu.dot_dimension_numbers<[1], [0], [0], [1], [0, 0, 1, 1], [], []>} : vector<8x128xbf16>, vector<128x784xbf16>, vector<8x784xf32> -> vector<8x784xf32>
    %c0_21 = arith.constant 0 : index
    %c0_22 = arith.constant 0 : index
    %28 = vector.load %arg9[%c0_21, %c0_22] : memref<1x784xf32, #tpu.memory_space<vmem>>, vector<1x784xf32>
    %29 = vector.broadcast %28 : vector<1x784xf32> to vector<8x784xf32>
    %30 = arith.addf %27, %29 : vector<8x784xf32>
    %31 = arith.negf %30 : vector<8x784xf32>
    %32 = math.exp %31 : vector<8x784xf32>
    %cst_23 = arith.constant 1.000000e+00 : f32
    %33 = vector.broadcast %cst_23 : f32 to vector<8x784xf32>
    %34 = arith.addf %33, %32 : vector<8x784xf32>
    %35 = arith.divf %33, %34 : vector<8x784xf32>
    %c0_24 = arith.constant 0 : index
    %c0_25 = arith.constant 0 : index
    %36 = vector.load %arg10[%c0_24, %c0_25] : memref<8x784xf32, #tpu.memory_space<vmem>>, vector<8x784xf32>
    tpu.vector_store %arg10[%c0_24, %c0_25], %35 {strides = array<i32>} : memref<8x784xf32, #tpu.memory_space<vmem>>, vector<8x784xf32>,
    return
  }
  func.func @transform_0(%arg0: i32) -> (i32, i32) {
    %c0_i32 = arith.constant 0 : i32
    %c0_i32_0 = arith.constant 0 : i32
    return %arg0, %c0_i32 : i32, i32
  }
  func.func @transform_1(%arg0: i32) -> (i32, i32) {
    %c0_i32 = arith.constant 0 : i32
    %c0_i32_0 = arith.constant 0 : i32
    %c0_i32_1 = arith.constant 0 : i32
    return %c0_i32, %c0_i32_0 : i32, i32
  }
  func.func @transform_2(%arg0: i32) -> (i32, i32) {
    %c0_i32 = arith.constant 0 : i32
    %c0_i32_0 = arith.constant 0 : i32
    %c0_i32_1 = arith.constant 0 : i32
    return %c0_i32, %c0_i32_0 : i32, i32
  }
  func.func @transform_3(%arg0: i32) -> (i32, i32) {
    %c0_i32 = arith.constant 0 : i32
    %c0_i32_0 = arith.constant 0 : i32
    %c0_i32_1 = arith.constant 0 : i32
    return %c0_i32, %c0_i32_0 : i32, i32
  }
  func.func @transform_4(%arg0: i32) -> (i32, i32) {
    %c0_i32 = arith.constant 0 : i32
    %c0_i32_0 = arith.constant 0 : i32
    %c0_i32_1 = arith.constant 0 : i32
    return %c0_i32, %c0_i32_0 : i32, i32
  }
  func.func @transform_5(%arg0: i32) -> (i32, i32) {
    %c0_i32 = arith.constant 0 : i32
    %c0_i32_0 = arith.constant 0 : i32
    %c0_i32_1 = arith.constant 0 : i32
    return %c0_i32, %c0_i32_0 : i32, i32
  }
  func.func @transform_6(%arg0: i32) -> (i32, i32) {
    %c0_i32 = arith.constant 0 : i32
    %c0_i32_0 = arith.constant 0 : i32
    %c0_i32_1 = arith.constant 0 : i32
    return %c0_i32, %c0_i32_0 : i32, i32
  }
  func.func @transform_7(%arg0: i32) -> (i32, i32) {
    %c0_i32 = arith.constant 0 : i32
    %c0_i32_0 = arith.constant 0 : i32
    %c0_i32_1 = arith.constant 0 : i32
    return %c0_i32, %c0_i32_0 : i32, i32
  }
  func.func @transform_8(%arg0: i32) -> (i32, i32) {
    %c0_i32 = arith.constant 0 : i32
    %c0_i32_0 = arith.constant 0 : i32
    %c0_i32_1 = arith.constant 0 : i32
    return %c0_i32, %c0_i32_0 : i32, i32
  }
  func.func @transform_9(%arg0: i32) -> (i32, i32) {
    %c0_i32 = arith.constant 0 : i32
    %c0_i32_0 = arith.constant 0 : i32
    return %arg0, %c0_i32 : i32, i32
  }
}

</mosaic_0001>

<llo_original>
// kernel: autoencoder_forward.1
$region0: #{autoencoder_forward.1}
  #allocation0 [shape = 'u32[]', space=smem, size = 0x4, offset = 0x4, fixed_abs, tag = 'smem constant byte address 0x4 - core index']
  #allocation1 [shape = 'u32[144,128]{1,0:T(1,128)}', space=vmem, size = 0x12000, scoped, tag = 'internal scratch']
  %s0 = inlined_call_operand.vmem [shape: f32[8,784], index: 0, kind: input, shape index: {}]
  %s1 = inlined_call_operand.vmem [shape: bf16[784,128], index: 1, kind: input, shape index: {}]
  %s2 = inlined_call_operand.vmem [shape: f32[1,128], index: 2, kind: input, shape index: {}]
  %s3 = inlined_call_operand.vmem [shape: bf16[128,64], index: 3, kind: input, shape index: {}]
  %s4 = inlined_call_operand.vmem [shape: f32[1,64], index: 4, kind: input, shape index: {}]
  %s5 = inlined_call_operand.vmem [shape: bf16[64,128], index: 5, kind: input, shape index: {}]
  %s6 = inlined_call_operand.vmem [shape: f32[1,128], index: 6, kind: input, shape index: {}]
  %s7 = inlined_call_operand.vmem [shape: bf16[128,784], index: 7, kind: input, shape index: {}]
  %s8 = inlined_call_operand.vmem [shape: f32[1,784], index: 8, kind: input, shape index: {}]
  %s9 = inlined_call_operand.hbm [shape: f32[8,784], index: 9, kind: output, shape index: {}]
  %s10 = sld [smem:[#allocation0]]
  $region46: #{autoencoder_forward.1} parent=0
    _
  %s12 = ssub.s32 1, %s10
  %s13 = scalar_select 0, %s12, %s10
  $region1: #{autoencoder_forward.1} parent=0
    #allocation2 [shape = 'u8[28672]{0}', space=vmem, size = 0x7000, scoped, tag = 'output window, operand 0, single buffered']
    #allocation3 [shape = 's32[1]{0}', space=sflag, size = 0x4, scoped, tag = 'scoped memory for autoencoder_forward.1']
    %14 = vsyncpa [#allocation3], 0
    // Predicated region
    $region2: #{autoencoder_forward.1} parent=1 // pred_check
      _
    $region3: #{autoencoder_forward.1} parent=1 // pred_check_branch
      %16 = sbr.rel (0) target = $region5
    $region4: #{autoencoder_forward.1} parent=1 // pred_region
      _
    $region5: #{autoencoder_forward.1} parent=1 // pred_fallthru
      _
    // Predicated region
    $region6: #{autoencoder_forward.1} parent=1 // pred_check
      _
    $region7: #{autoencoder_forward.1} parent=1 // pred_check_branch
      %18 = sbr.rel (0) target = $region9
    $region8: #{autoencoder_forward.1} parent=1 // pred_region
      _
    $region9: #{autoencoder_forward.1} parent=1 // pred_fallthru
      _
    // Predicated region
    $region10: #{autoencoder_forward.1} parent=1 // pred_check
      _
    $region11: #{autoencoder_forward.1} parent=1 // pred_check_branch
      %20 = sbr.rel (0) target = $region13
    $region12: #{autoencoder_forward.1} parent=1 // pred_region
      _
    $region13: #{autoencoder_forward.1} parent=1 // pred_fallthru
      _
    // Predicated region
    $region14: #{autoencoder_forward.1} parent=1 // pred_check
      _
    $region15: #{autoencoder_forward.1} parent=1 // pred_check_branch
      %22 = sbr.rel (0) target = $region17
    $region16: #{autoencoder_forward.1} parent=1 // pred_region
      _
    $region17: #{autoencoder_forward.1} parent=1 // pred_fallthru
      _
    // Predicated region
    $region18: #{autoencoder_forward.1} parent=1 // pred_check
      _
    $region19: #{autoencoder_forward.1} parent=1 // pred_check_branch
      %24 = sbr.rel (0) target = $region21
    $region20: #{autoencoder_forward.1} parent=1 // pred_region
      _
    $region21: #{autoencoder_forward.1} parent=1 // pred_fallthru
      _
    // Predicated region
    $region22: #{autoencoder_forward.1} parent=1 // pred_check
      _
    $region23: #{autoencoder_forward.1} parent=1 // pred_check_branch
      %26 = sbr.rel (0) target = $region25
    $region24: #{autoencoder_forward.1} parent=1 // pred_region
      _
    $region25: #{autoencoder_forward.1} parent=1 // pred_fallthru
      _
    // Predicated region
    $region26: #{autoencoder_forward.1} parent=1 // pred_check
      _
    $region27: #{autoencoder_forward.1} parent=1 // pred_check_branch
      %28 = sbr.rel (0) target = $region29
    $region28: #{autoencoder_forward.1} parent=1 // pred_region
      _
    $region29: #{autoencoder_forward.1} parent=1 // pred_fallthru
      _
    // Predicated region
    $region30: #{autoencoder_forward.1} parent=1 // pred_check
      _
    $region31: #{autoencoder_forward.1} parent=1 // pred_check_branch
      %30 = sbr.rel (0) target = $region33
    $region32: #{autoencoder_forward.1} parent=1 // pred_region
      _
    $region33: #{autoencoder_forward.1} parent=1 // pred_fallthru
      _
    // Predicated region
    $region34: #{autoencoder_forward.1} parent=1 // pred_check
      _
    $region35: #{autoencoder_forward.1} parent=1 // pred_check_branch
      %32 = sbr.rel (0) target = $region37
    $region36: #{autoencoder_forward.1} parent=1 // pred_region
      _
    $region37: #{autoencoder_forward.1} parent=1 // pred_fallthru
      _
    %v34 = vld [vmem:[%s0] sm:$0xff]
    %v35 = vld [vmem:[%s0 + $0x8] sm:$0xff]
    %v36 = vld [vmem:[%s0 + $0x10] sm:$0xff]
    %v37 = vld [vmem:[%s0 + $0x18] sm:$0xff]
    %v38 = vld [vmem:[%s0 + $0x20] sm:$0xff]
    %v39 = vld [vmem:[%s0 + $0x28] sm:$0xff]
    %v40 = vld [vmem:[%s0 + $0x30] sm:$0xff]
    %v41 = vpack.c.bf16 %v34, %v34
    %v42 = vpack.c.bf16 %v35, %v35
    %v43 = vpack.c.bf16 %v36, %v36
    %v44 = vpack.c.bf16 %v37, %v37
    %v45 = vpack.c.bf16 %v38, %v38
    %v46 = vpack.c.bf16 %v39, %v39
    %v47 = vpack.c.bf16 %v40, %v40
    %v48 = vld [vmem:[%s1] sm:$0xf]
    %v49 = vld [vmem:[%s1 + $0x4] sm:$0xf]
    %v50 = vld [vmem:[%s1 + $0x8] sm:$0xf]
    %v51 = vld [vmem:[%s1 + $0xc] sm:$0xf]
    %v52 = vld [vmem:[%s1 + $0x10] sm:$0xf]
    %v53 = vld [vmem:[%s1 + $0x14] sm:$0xf]
    %v54 = vld [vmem:[%s1 + $0x18] sm:$0xf]
    %v55 = vld [vmem:[%s1 + $0x1c] sm:$0xf]
    %v56 = vld [vmem:[%s1 + $0x20] sm:$0xf]
    %v57 = vld [vmem:[%s1 + $0x24] sm:$0xf]
    %v58 = vld [vmem:[%s1 + $0x28] sm:$0xf]
    %v59 = vld [vmem:[%s1 + $0x2c] sm:$0xf]
    %v60 = vld [vmem:[%s1 + $0x30] sm:$0xf]
    %v61 = vld [vmem:[%s1 + $0x34] sm:$0xf]
    %v62 = vld [vmem:[%s1 + $0x38] sm:$0xf]
    %v63 = vld [vmem:[%s1 + $0x3c] sm:$0xf]
    %v64 = vld [vmem:[%s1 + $0x40] sm:$0xf]
    %v65 = vld [vmem:[%s1 + $0x44] sm:$0xf]
    %v66 = vld [vmem:[%s1 + $0x48] sm:$0xf]
    %v67 = vld [vmem:[%s1 + $0x4c] sm:$0xf]
    %v68 = vld [vmem:[%s1 + $0x50] sm:$0xf]
    %v69 = vld [vmem:[%s1 + $0x54] sm:$0xf]
    %v70 = vld [vmem:[%s1 + $0x58] sm:$0xf]
    %v71 = vld [vmem:[%s1 + $0x5c] sm:$0xf]
    %v72 = vld [vmem:[%s1 + $0x60] sm:$0xf]
    %v73 = vld [vmem:[%s1 + $0x64] sm:$0xf]
    %v74 = vld [vmem:[%s1 + $0x68] sm:$0xf]
    %v75 = vld [vmem:[%s1 + $0x6c] sm:$0xf]
    %v76 = vld [vmem:[%s1 + $0x70] sm:$0xf]
    %v77 = vld [vmem:[%s1 + $0x74] sm:$0xf]
    %v78 = vld [vmem:[%s1 + $0x78] sm:$0xf]
    %v79 = vld [vmem:[%s1 + $0x7c] sm:$0xf]
    %v80 = vld [vmem:[%s1 + $0x80] sm:$0xf]
    %v81 = vld [vmem:[%s1 + $0x84] sm:$0xf]
    %v82 = vld [vmem:[%s1 + $0x88] sm:$0xf]
    %v83 = vld [vmem:[%s1 + $0x8c] sm:$0xf]
    %v84 = vld [vmem:[%s1 + $0x90] sm:$0xf]
    %v85 = vld [vmem:[%s1 + $0x94] sm:$0xf]
    %v86 = vld [vmem:[%s1 + $0x98] sm:$0xf]
    %v87 = vld [vmem:[%s1 + $0x9c] sm:$0xf]
    %v88 = vld [vmem:[%s1 + $0xa0] sm:$0xf]
    %v89 = vld [vmem:[%s1 + $0xa4] sm:$0xf]
    %v90 = vld [vmem:[%s1 + $0xa8] sm:$0xf]
    %v91 = vld [vmem:[%s1 + $0xac] sm:$0xf]
    %v92 = vld [vmem:[%s1 + $0xb0] sm:$0xf]
    %v93 = vld [vmem:[%s1 + $0xb4] sm:$0xf]
    %v94 = vld [vmem:[%s1 + $0xb8] sm:$0xf]
    %v95 = vld [vmem:[%s1 + $0xbc] sm:$0xf]
    %v96 = vld [vmem:[%s1 + $0xc0] sm:$0xf]
    %v97 = vld [vmem:[%s1 + $0xc4] sm:$0xf]
    %v98 = vld [vmem:[%s1 + $0xc8] sm:$0xf]
    %v99 = vld [vmem:[%s1 + $0xcc] sm:$0xf]
    %v100 = vld [vmem:[%s1 + $0xd0] sm:$0xf]
    %v101 = vld [vmem:[%s1 + $0xd4] sm:$0xf]
    %v102 = vld [vmem:[%s1 + $0xd8] sm:$0xf]
    %v103 = vld [vmem:[%s1 + $0xdc] sm:$0xf]
    %v104 = vld [vmem:[%s1 + $0xe0] sm:$0xf]
    %v105 = vld [vmem:[%s1 + $0xe4] sm:$0xf]
    %v106 = vld [vmem:[%s1 + $0xe8] sm:$0xf]
    %v107 = vld [vmem:[%s1 + $0xec] sm:$0xf]
    %v108 = vld [vmem:[%s1 + $0xf0] sm:$0xf]
    %v109 = vld [vmem:[%s1 + $0xf4] sm:$0xf]
    %v110 = vld [vmem:[%s1 + $0xf8] sm:$0xf]
    %v111 = vld [vmem:[%s1 + $0xfc] sm:$0xf]
    %v112 = vld [vmem:[%s1 + $0x100] sm:$0xf]
    %v113 = vld [vmem:[%s1 + $0x104] sm:$0xf]
    %v114 = vld [vmem:[%s1 + $0x108] sm:$0xf]
    %v115 = vld [vmem:[%s1 + $0x10c] sm:$0xf]
    %v116 = vld [vmem:[%s1 + $0x110] sm:$0xf]
    %v117 = vld [vmem:[%s1 + $0x114] sm:$0xf]
    %v118 = vld [vmem:[%s1 + $0x118] sm:$0xf]
    %v119 = vld [vmem:[%s1 + $0x11c] sm:$0xf]
    %v120 = vld [vmem:[%s1 + $0x120] sm:$0xf]
    %v121 = vld [vmem:[%s1 + $0x124] sm:$0xf]
    %v122 = vld [vmem:[%s1 + $0x128] sm:$0xf]
    %v123 = vld [vmem:[%s1 + $0x12c] sm:$0xf]
    %v124 = vld [vmem:[%s1 + $0x130] sm:$0xf]
    %v125 = vld [vmem:[%s1 + $0x134] sm:$0xf]
    %v126 = vld [vmem:[%s1 + $0x138] sm:$0xf]
    %v127 = vld [vmem:[%s1 + $0x13c] sm:$0xf]
    %v128 = vld [vmem:[%s1 + $0x140] sm:$0xf]
    %v129 = vld [vmem:[%s1 + $0x144] sm:$0xf]
    %v130 = vld [vmem:[%s1 + $0x148] sm:$0xf]
    %v131 = vld [vmem:[%s1 + $0x14c] sm:$0xf]
    %v132 = vld [vmem:[%s1 + $0x150] sm:$0xf]
    %v133 = vld [vmem:[%s1 + $0x154] sm:$0xf]
    %v134 = vld [vmem:[%s1 + $0x158] sm:$0xf]
    %v135 = vld [vmem:[%s1 + $0x15c] sm:$0xf]
    %v136 = vld [vmem:[%s1 + $0x160] sm:$0xf]
    %v137 = vld [vmem:[%s1 + $0x164] sm:$0xf]
    %v138 = vld [vmem:[%s1 + $0x168] sm:$0xf]
    %v139 = vld [vmem:[%s1 + $0x16c] sm:$0xf]
    %v140 = vld [vmem:[%s1 + $0x170] sm:$0xf]
    %v141 = vld [vmem:[%s1 + $0x174] sm:$0xf]
    %v142 = vld [vmem:[%s1 + $0x178] sm:$0xf]
    %v143 = vld [vmem:[%s1 + $0x17c] sm:$0xf]
    %v144 = vld [vmem:[%s1 + $0x180] sm:$0xf]
    %v145 = vld [vmem:[%s1 + $0x184] sm:$0xf]
    %v146 = vld [vmem:[%s2] sm:$0x1]
    %v148 = vlaneseq
    %v149 = vshrl.u32 %v148, 7
    %v150 = vsub.s32 0, %v149
    %v151 = vrot.slane %v146, %v150
    %v251 = vunpack.c.l.b16 %v48
    %v252 = vunpack.c.l.b16 %v49
    %v253 = vunpack.c.l.b16 %v50
    %v254 = vunpack.c.l.b16 %v51
    %v255 = vunpack.c.l.b16 %v52
    %v256 = vunpack.c.l.b16 %v53
    %v257 = vunpack.c.l.b16 %v54
    %v258 = vunpack.c.l.b16 %v55
    %v259 = vunpack.c.l.b16 %v56
    %v260 = vunpack.c.l.b16 %v57
    %v261 = vunpack.c.l.b16 %v58
    %v262 = vunpack.c.l.b16 %v59
    %v263 = vunpack.c.l.b16 %v60
    %v264 = vunpack.c.l.b16 %v61
    %v265 = vunpack.c.l.b16 %v62
    %v266 = vunpack.c.l.b16 %v63
    %v267 = vunpack.c.l.b16 %v64
    %v268 = vunpack.c.l.b16 %v65
    %v269 = vunpack.c.l.b16 %v66
    %v270 = vunpack.c.l.b16 %v67
    %v271 = vunpack.c.l.b16 %v68
    %v272 = vunpack.c.l.b16 %v69
    %v273 = vunpack.c.l.b16 %v70
    %v274 = vunpack.c.l.b16 %v71
    %v275 = vunpack.c.l.b16 %v72
    %v276 = vunpack.c.l.b16 %v73
    %v277 = vunpack.c.l.b16 %v74
    %v278 = vunpack.c.l.b16 %v75
    %v279 = vunpack.c.l.b16 %v76
    %v280 = vunpack.c.l.b16 %v77
    %v281 = vunpack.c.l.b16 %v78
    %v282 = vunpack.c.l.b16 %v79
    %v283 = vunpack.c.l.b16 %v80
    %v284 = vunpack.c.l.b16 %v81
    %v285 = vunpack.c.l.b16 %v82
    %v286 = vunpack.c.l.b16 %v83
    %v287 = vunpack.c.l.b16 %v84
    %v288 = vunpack.c.l.b16 %v85
    %v289 = vunpack.c.l.b16 %v86
    %v290 = vunpack.c.l.b16 %v87
    %v291 = vunpack.c.l.b16 %v88
    %v292 = vunpack.c.l.b16 %v89
    %v293 = vunpack.c.l.b16 %v90
    %v294 = vunpack.c.l.b16 %v91
    %v295 = vunpack.c.l.b16 %v92
    %v296 = vunpack.c.l.b16 %v93
    %v297 = vunpack.c.l.b16 %v94
    %v298 = vunpack.c.l.b16 %v95
    %v299 = vunpack.c.l.b16 %v96
    %v300 = vunpack.c.l.b16 %v97
    %v301 = vunpack.c.l.b16 %v98
    %v302 = vunpack.c.l.b16 %v99
    %v303 = vunpack.c.l.b16 %v100
    %v304 = vunpack.c.l.b16 %v101
    %v305 = vunpack.c.l.b16 %v102
    %v306 = vunpack.c.l.b16 %v103
    %v307 = vunpack.c.l.b16 %v104
    %v308 = vunpack.c.l.b16 %v105
    %v309 = vunpack.c.l.b16 %v106
    %v310 = vunpack.c.l.b16 %v107
    %v311 = vunpack.c.l.b16 %v108
    %v312 = vunpack.c.l.b16 %v109
    %v313 = vunpack.c.l.b16 %v110
    %v314 = vunpack.c.l.b16 %v111
    %v315 = vunpack.c.l.b16 %v112
    %v316 = vunpack.c.l.b16 %v113
    %v317 = vunpack.c.l.b16 %v114
    %v318 = vunpack.c.l.b16 %v115
    %v319 = vunpack.c.l.b16 %v116
    %v320 = vunpack.c.l.b16 %v117
    %v321 = vunpack.c.l.b16 %v118
    %v322 = vunpack.c.l.b16 %v119
    %v323 = vunpack.c.l.b16 %v120
    %v324 = vunpack.c.l.b16 %v121
    %v325 = vunpack.c.l.b16 %v122
    %v326 = vunpack.c.l.b16 %v123
    %v327 = vunpack.c.l.b16 %v124
    %v328 = vunpack.c.l.b16 %v125
    %v329 = vunpack.c.l.b16 %v126
    %v330 = vunpack.c.l.b16 %v127
    %v331 = vunpack.c.l.b16 %v128
    %v332 = vunpack.c.l.b16 %v129
    %v333 = vunpack.c.l.b16 %v130
    %v334 = vunpack.c.l.b16 %v131
    %v335 = vunpack.c.l.b16 %v132
    %v336 = vunpack.c.l.b16 %v133
    %v337 = vunpack.c.l.b16 %v134
    %v338 = vunpack.c.l.b16 %v135
    %v339 = vunpack.c.l.b16 %v136
    %v340 = vunpack.c.l.b16 %v137
    %v341 = vunpack.c.l.b16 %v138
    %v342 = vunpack.c.l.b16 %v139
    %v343 = vunpack.c.l.b16 %v140
    %v344 = vunpack.c.l.b16 %v141
    %v345 = vunpack.c.l.b16 %v142
    %v346 = vunpack.c.l.b16 %v143
    %v347 = vunpack.c.l.b16 %v144
    %v348 = vunpack.c.l.b16 %v145
    %v349 = vpack.c.b16 %v252, %v251
    %v350 = vpack.c.b16 %v254, %v253
    %v351 = vpack.c.b16 %v256, %v255
    %v352 = vpack.c.b16 %v258, %v257
    %v353 = vpack.c.b16 %v260, %v259
    %v354 = vpack.c.b16 %v262, %v261
    %v355 = vpack.c.b16 %v264, %v263
    %v356 = vpack.c.b16 %v266, %v265
    %v357 = vpack.c.b16 %v268, %v267
    %v358 = vpack.c.b16 %v270, %v269
    %v359 = vpack.c.b16 %v272, %v271
    %v360 = vpack.c.b16 %v274, %v273
    %v361 = vpack.c.b16 %v276, %v275
    %v362 = vpack.c.b16 %v278, %v277
    %v363 = vpack.c.b16 %v280, %v279
    %v364 = vpack.c.b16 %v282, %v281
    %v365 = vpack.c.b16 %v284, %v283
    %v366 = vpack.c.b16 %v286, %v285
    %v367 = vpack.c.b16 %v288, %v287
    %v368 = vpack.c.b16 %v290, %v289
    %v369 = vpack.c.b16 %v292, %v291
    %v370 = vpack.c.b16 %v294, %v293
    %v371 = vpack.c.b16 %v296, %v295
    %v372 = vpack.c.b16 %v298, %v297
    %v373 = vpack.c.b16 %v300, %v299
    %v374 = vpack.c.b16 %v302, %v301
    %v375 = vpack.c.b16 %v304, %v303
    %v376 = vpack.c.b16 %v306, %v305
    %v377 = vpack.c.b16 %v308, %v307
    %v378 = vpack.c.b16 %v310, %v309
    %v379 = vpack.c.b16 %v312, %v311
    %v380 = vpack.c.b16 %v314, %v313
    %v381 = vpack.c.b16 %v316, %v315
    %v382 = vpack.c.b16 %v318, %v317
    %v383 = vpack.c.b16 %v320, %v319
    %v384 = vpack.c.b16 %v322, %v321
    %v385 = vpack.c.b16 %v324, %v323
    %v386 = vpack.c.b16 %v326, %v325
    %v387 = vpack.c.b16 %v328, %v327
    %v388 = vpack.c.b16 %v330, %v329
    %v389 = vpack.c.b16 %v332, %v331
    %v390 = vpack.c.b16 %v334, %v333
    %v391 = vpack.c.b16 %v336, %v335
    %v392 = vpack.c.b16 %v338, %v337
    %v393 = vpack.c.b16 %v340, %v339
    %v394 = vpack.c.b16 %v342, %v341
    %v395 = vpack.c.b16 %v344, %v343
    %v396 = vpack.c.b16 %v346, %v345
    %v397 = vpack.c.b16 %v348, %v347
    %vm447 = vcmask 130048
    %v449 = vsel %vm447, %v47, 0
    %451 = vmatprep.subr.bf16.mxu0 0
    %452 = vmatpush1.bf16.msra.mxu0 %v349
    %453 = vmatprep.subr.bf16.mxu0 0
    %454 = vmatpush1.bf16.msra.mxu0 %v350
    %455 = vmatprep.subr.bf16.mxu0 0
    %456 = vmatpush1.bf16.msra.mxu0 %v351
    %457 = vmatprep.subr.bf16.mxu0 0
    %458 = vmatpush1.bf16.msra.mxu0 %v352
    %459 = vmatprep.subr.bf16.mxu0 0
    %460 = vmatpush1.bf16.msra.mxu0 %v353
    %461 = vmatprep.subr.bf16.mxu0 0
    %462 = vmatpush1.bf16.msra.mxu0 %v354
    %463 = vmatprep.subr.bf16.mxu0 0
    %464 = vmatpush1.bf16.msra.mxu0 %v355
    %465 = vmatprep.subr.bf16.mxu0 0
    %466 = vmatpush1.bf16.msra.mxu0 %v356
    %467 = vmatprep.subr.bf16.mxu0 0
    %468 = vmatpush1.bf16.msra.mxu0 %v357
    %469 = vmatprep.subr.bf16.mxu0 0
    %470 = vmatpush1.bf16.msra.mxu0 %v358
    %471 = vmatprep.subr.bf16.mxu0 0
    %472 = vmatpush1.bf16.msra.mxu0 %v359
    %473 = vmatprep.subr.bf16.mxu0 0
    %474 = vmatpush1.bf16.msra.mxu0 %v360
    %475 = vmatprep.subr.bf16.mxu0 0
    %476 = vmatpush1.bf16.msra.mxu0 %v361
    %477 = vmatprep.subr.bf16.mxu0 0
    %478 = vmatpush1.bf16.msra.mxu0 %v362
    %479 = vmatprep.subr.bf16.mxu0 0
    %480 = vmatpush1.bf16.msra.mxu0 %v363
    %481 = vmatprep.subr.bf16.mxu0 0
    %482 = vmatpush1.bf16.msra.mxu0 %v364
    %483 = vmatprep.mubr.bf16.mxu0 %v42
    %484 = vmatmul.mubr.bf16.gmra.mrb[0].mxu0 %v41
    %v485 = vpop.f32.mrb[0].mxu0
    %v486 = vadd.f32 %v151, %v485
    %v487 = vpop.f32.mrb[0].mxu0
    %v488 = vpop.f32.mrb[0].mxu0
    %v489 = vpop.f32.mrb[0].mxu0
    %490 = vdwg.mxu0
    %491 = vmatprep.subr.bf16.mxu0 0
    %492 = vmatpush1.bf16.msra.mxu0 %v365
    %493 = vmatprep.subr.bf16.mxu0 0
    %494 = vmatpush1.bf16.msra.mxu0 %v366
    %495 = vmatprep.subr.bf16.mxu0 0
    %496 = vmatpush1.bf16.msra.mxu0 %v367
    %497 = vmatprep.subr.bf16.mxu0 0
    %498 = vmatpush1.bf16.msra.mxu0 %v368
    %499 = vmatprep.subr.bf16.mxu0 0
    %500 = vmatpush1.bf16.msra.mxu0 %v369
    %501 = vmatprep.subr.bf16.mxu0 0
    %502 = vmatpush1.bf16.msra.mxu0 %v370
    %503 = vmatprep.subr.bf16.mxu0 0
    %504 = vmatpush1.bf16.msra.mxu0 %v371
    %505 = vmatprep.subr.bf16.mxu0 0
    %506 = vmatpush1.bf16.msra.mxu0 %v372
    %507 = vmatprep.subr.bf16.mxu0 0
    %508 = vmatpush1.bf16.msra.mxu0 %v373
    %509 = vmatprep.subr.bf16.mxu0 0
    %510 = vmatpush1.bf16.msra.mxu0 %v374
    %511 = vmatprep.subr.bf16.mxu0 0
    %512 = vmatpush1.bf16.msra.mxu0 %v375
    %513 = vmatprep.subr.bf16.mxu0 0
    %514 = vmatpush1.bf16.msra.mxu0 %v376
    %515 = vmatprep.subr.bf16.mxu0 0
    %516 = vmatpush1.bf16.msra.mxu0 %v377
    %517 = vmatprep.subr.bf16.mxu0 0
    %518 = vmatpush1.bf16.msra.mxu0 %v378
    %519 = vmatprep.subr.bf16.mxu0 0
    %520 = vmatpush1.bf16.msra.mxu0 %v379
    %521 = vmatprep.subr.bf16.mxu0 0
    %522 = vmatpush1.bf16.msra.mxu0 %v380
    %523 = vmatprep.mubr.bf16.mxu0 %v44
    %524 = vmatmul.mubr.bf16.gmra.mrb[0].mxu0 %v43
    %v525 = vpop.f32.mrb[0].mxu0
    %v526 = vadd.f32 %v486, %v525
    %v527 = vpop.f32.mrb[0].mxu0
    %v528 = vpop.f32.mrb[0].mxu0
    %v529 = vpop.f32.mrb[0].mxu0
    %530 = vdwg.mxu0
    %531 = vmatprep.subr.bf16.mxu0 0
    %532 = vmatpush1.bf16.msra.mxu0 %v381
    %533 = vmatprep.subr.bf16.mxu0 0
    %534 = vmatpush1.bf16.msra.mxu0 %v382
    %535 = vmatprep.subr.bf16.mxu0 0
    %536 = vmatpush1.bf16.msra.mxu0 %v383
    %537 = vmatprep.subr.bf16.mxu0 0
    %538 = vmatpush1.bf16.msra.mxu0 %v384
    %539 = vmatprep.subr.bf16.mxu0 0
    %540 = vmatpush1.bf16.msra.mxu0 %v385
    %541 = vmatprep.subr.bf16.mxu0 0
    %542 = vmatpush1.bf16.msra.mxu0 %v386
    %543 = vmatprep.subr.bf16.mxu0 0
    %544 = vmatpush1.bf16.msra.mxu0 %v387
    %545 = vmatprep.subr.bf16.mxu0 0
    %546 = vmatpush1.bf16.msra.mxu0 %v388
    %547 = vmatprep.subr.bf16.mxu0 0
    %548 = vmatpush1.bf16.msra.mxu0 %v389
    %549 = vmatprep.subr.bf16.mxu0 0
    %550 = vmatpush1.bf16.msra.mxu0 %v390
    %551 = vmatprep.subr.bf16.mxu0 0
    %552 = vmatpush1.bf16.msra.mxu0 %v391
    %553 = vmatprep.subr.bf16.mxu0 0
    %554 = vmatpush1.bf16.msra.mxu0 %v392
    %555 = vmatprep.subr.bf16.mxu0 0
    %556 = vmatpush1.bf16.msra.mxu0 %v393
    %557 = vmatprep.subr.bf16.mxu0 0
    %558 = vmatpush1.bf16.msra.mxu0 %v394
    %559 = vmatprep.subr.bf16.mxu0 0
    %560 = vmatpush1.bf16.msra.mxu0 %v395
    %561 = vmatprep.subr.bf16.mxu0 0
    %562 = vmatpush1.bf16.msra.mxu0 %v396
    %563 = vmatprep.mubr.bf16.mxu0 %v46
    %564 = vmatmul.mubr.bf16.gmra.mrb[0].mxu0 %v45
    %v565 = vpop.f32.mrb[0].mxu0
    %v566 = vadd.f32 %v526, %v565
    %v567 = vpop.f32.mrb[0].mxu0
    %v568 = vpop.f32.mrb[0].mxu0
    %v569 = vpop.f32.mrb[0].mxu0
    %570 = vdwg.mxu0
    %571 = vmatprep.subr.bf16.mxu0 0
    %572 = vmatpush1.bf16.msra.mxu0 %v397
    %573 = vmatprep.subr.bf16.mxu0 0
    %574 = vmatpush1.bf16.msra.mxu0 0
    %575 = vmatprep.subr.bf16.mxu0 0
    %576 = vmatpush1.bf16.msra.mxu0 0
    %577 = vmatprep.subr.bf16.mxu0 0
    %578 = vmatpush1.bf16.msra.mxu0 0
    %579 = vmatprep.subr.bf16.mxu0 0
    %580 = vmatpush1.bf16.msra.mxu0 0
    %581 = vmatprep.subr.bf16.mxu0 0
    %582 = vmatpush1.bf16.msra.mxu0 0
    %583 = vmatprep.subr.bf16.mxu0 0
    %584 = vmatpush1.bf16.msra.mxu0 0
    %585 = vmatprep.subr.bf16.mxu0 0
    %586 = vmatpush1.bf16.msra.mxu0 0
    %587 = vmatprep.subr.bf16.mxu0 0
    %588 = vmatpush1.bf16.msra.mxu0 0
    %589 = vmatprep.subr.bf16.mxu0 0
    %590 = vmatpush1.bf16.msra.mxu0 0
    %591 = vmatprep.subr.bf16.mxu0 0
    %592 = vmatpush1.bf16.msra.mxu0 0
    %593 = vmatprep.subr.bf16.mxu0 0
    %594 = vmatpush1.bf16.msra.mxu0 0
    %595 = vmatprep.subr.bf16.mxu0 0
    %596 = vmatpush1.bf16.msra.mxu0 0
    %597 = vmatprep.subr.bf16.mxu0 0
    %598 = vmatpush1.bf16.msra.mxu0 0
    %599 = vmatprep.subr.bf16.mxu0 0
    %600 = vmatpush1.bf16.msra.mxu0 0
    %601 = vmatprep.subr.bf16.mxu0 0
    %602 = vmatpush1.bf16.msra.mxu0 0
    %603 = vmatprep.mubr.bf16.mxu0 0
    %604 = vmatmul.mubr.bf16.gmra.mrb[0].mxu0 %v449
    %v605 = vpop.f32.mrb[0].mxu0
    %v606 = vadd.f32 %v566, %v605
    %v607 = vpop.f32.mrb[0].mxu0
    %v608 = vpop.f32.mrb[0].mxu0
    %v609 = vpop.f32.mrb[0].mxu0
    %610 = vdwg.mxu0
    %v611 = vmax.f32 %v606, 0.0
    %v612 = vpack.c.bf16 %v611, %v611
    %v613 = vld [vmem:[%s3] sm:$0xf]
    %v614 = vld [vmem:[%s3 + $0x4] sm:$0xf]
    %v615 = vld [vmem:[%s3 + $0x8] sm:$0xf]
    %v616 = vld [vmem:[%s3 + $0xc] sm:$0xf]
    %v617 = vld [vmem:[%s3 + $0x10] sm:$0xf]
    %v618 = vld [vmem:[%s3 + $0x14] sm:$0xf]
    %v619 = vld [vmem:[%s3 + $0x18] sm:$0xf]
    %v620 = vld [vmem:[%s3 + $0x1c] sm:$0xf]
    %v621 = vld [vmem:[%s3 + $0x20] sm:$0xf]
    %v622 = vld [vmem:[%s3 + $0x24] sm:$0xf]
    %v623 = vld [vmem:[%s3 + $0x28] sm:$0xf]
    %v624 = vld [vmem:[%s3 + $0x2c] sm:$0xf]
    %v625 = vld [vmem:[%s3 + $0x30] sm:$0xf]
    %v626 = vld [vmem:[%s3 + $0x34] sm:$0xf]
    %v627 = vld [vmem:[%s3 + $0x38] sm:$0xf]
    %v628 = vld [vmem:[%s3 + $0x3c] sm:$0xf]
    %v629 = vld [vmem:[%s4] sm:$0x1]
    %v631 = vlaneseq
    %v632 = vshrl.u32 %v631, 7
    %v633 = vsub.s32 0, %v632
    %v634 = vrot.slane %v629, %v633
    %v652 = vunpack.c.l.b16 %v613
    %v653 = vunpack.c.l.b16 %v614
    %v654 = vunpack.c.l.b16 %v615
    %v655 = vunpack.c.l.b16 %v616
    %v656 = vunpack.c.l.b16 %v617
    %v657 = vunpack.c.l.b16 %v618
    %v658 = vunpack.c.l.b16 %v619
    %v659 = vunpack.c.l.b16 %v620
    %v660 = vunpack.c.l.b16 %v621
    %v661 = vunpack.c.l.b16 %v622
    %v662 = vunpack.c.l.b16 %v623
    %v663 = vunpack.c.l.b16 %v624
    %v664 = vunpack.c.l.b16 %v625
    %v665 = vunpack.c.l.b16 %v626
    %v666 = vunpack.c.l.b16 %v627
    %v667 = vunpack.c.l.b16 %v628
    %v668 = vpack.c.b16 %v653, %v652
    %v669 = vpack.c.b16 %v655, %v654
    %v670 = vpack.c.b16 %v657, %v656
    %v671 = vpack.c.b16 %v659, %v658
    %v672 = vpack.c.b16 %v661, %v660
    %v673 = vpack.c.b16 %v663, %v662
    %v674 = vpack.c.b16 %v665, %v664
    %v675 = vpack.c.b16 %v667, %v666
    %684 = vmatprep.subr.bf16.mxu0 0
    %685 = vmatpush1.bf16.msra.mxu0 %v668
    %686 = vmatprep.subr.bf16.mxu0 0
    %687 = vmatpush1.bf16.msra.mxu0 %v669
    %688 = vmatprep.subr.bf16.mxu0 0
    %689 = vmatpush1.bf16.msra.mxu0 %v670
    %690 = vmatprep.subr.bf16.mxu0 0
    %691 = vmatpush1.bf16.msra.mxu0 %v671
    %692 = vmatprep.subr.bf16.mxu0 0
    %693 = vmatpush1.bf16.msra.mxu0 %v672
    %694 = vmatprep.subr.bf16.mxu0 0
    %695 = vmatpush1.bf16.msra.mxu0 %v673
    %696 = vmatprep.subr.bf16.mxu0 0
    %697 = vmatpush1.bf16.msra.mxu0 %v674
    %698 = vmatprep.subr.bf16.mxu0 0
    %699 = vmatpush1.bf16.msra.mxu0 %v675
    %700 = vmatprep.subr.bf16.mxu0 0
    %701 = vmatpush1.bf16.msra.mxu0 0
    %702 = vmatprep.subr.bf16.mxu0 0
    %703 = vmatpush1.bf16.msra.mxu0 0
    %704 = vmatprep.subr.bf16.mxu0 0
    %705 = vmatpush1.bf16.msra.mxu0 0
    %706 = vmatprep.subr.bf16.mxu0 0
    %707 = vmatpush1.bf16.msra.mxu0 0
    %708 = vmatprep.subr.bf16.mxu0 0
    %709 = vmatpush1.bf16.msra.mxu0 0
    %710 = vmatprep.subr.bf16.mxu0 0
    %711 = vmatpush1.bf16.msra.mxu0 0
    %712 = vmatprep.subr.bf16.mxu0 0
    %713 = vmatpush1.bf16.msra.mxu0 0
    %714 = vmatprep.subr.bf16.mxu0 0
    %715 = vmatpush1.bf16.msra.mxu0 0
    %716 = vmatprep.mubr.bf16.mxu0 0
    %717 = vmatmul.mubr.bf16.gmra.mrb[0].mxu0 %v612
    %v718 = vpop.f32.mrb[0].mxu0
    %v719 = vadd.f32 %v634, %v718
    %v720 = vpop.f32.mrb[0].mxu0
    %v721 = vpop.f32.mrb[0].mxu0
    %v722 = vpop.f32.mrb[0].mxu0
    %723 = vdwg.mxu0
    %v724 = vmax.f32 %v719, 0.0
    %v725 = vpack.c.bf16 %v724, %v724
    %v726 = vld [vmem:[%s5] sm:$0xf]
    %v727 = vld [vmem:[%s5 + $0x4] sm:$0xf]
    %v728 = vld [vmem:[%s5 + $0x8] sm:$0xf]
    %v729 = vld [vmem:[%s5 + $0xc] sm:$0xf]
    %v730 = vld [vmem:[%s5 + $0x10] sm:$0xf]
    %v731 = vld [vmem:[%s5 + $0x14] sm:$0xf]
    %v732 = vld [vmem:[%s5 + $0x18] sm:$0xf]
    %v733 = vld [vmem:[%s5 + $0x1c] sm:$0xf]
    %v734 = vld [vmem:[%s6] sm:$0x1]
    %v736 = vlaneseq
    %v737 = vshrl.u32 %v736, 7
    %v738 = vsub.s32 0, %v737
    %v739 = vrot.slane %v734, %v738
    %v749 = vunpack.c.l.b16 %v726
    %v750 = vunpack.c.l.b16 %v727
    %v751 = vunpack.c.l.b16 %v728
    %v752 = vunpack.c.l.b16 %v729
    %v753 = vunpack.c.l.b16 %v730
    %v754 = vunpack.c.l.b16 %v731
    %v755 = vunpack.c.l.b16 %v732
    %v756 = vunpack.c.l.b16 %v733
    %v757 = vpack.c.b16 %v750, %v749
    %v758 = vpack.c.b16 %v752, %v751
    %v759 = vpack.c.b16 %v754, %v753
    %v760 = vpack.c.b16 %v756, %v755
    %vm765 = vcmask 523264
    %v767 = vsel %vm765, %v725, 0
    %769 = vmatprep.subr.bf16.mxu0 0
    %770 = vmatpush1.bf16.msra.mxu0 %v757
    %771 = vmatprep.subr.bf16.mxu0 0
    %772 = vmatpush1.bf16.msra.mxu0 %v758
    %773 = vmatprep.subr.bf16.mxu0 0
    %774 = vmatpush1.bf16.msra.mxu0 %v759
    %775 = vmatprep.subr.bf16.mxu0 0
    %776 = vmatpush1.bf16.msra.mxu0 %v760
    %777 = vmatprep.subr.bf16.mxu0 0
    %778 = vmatpush1.bf16.msra.mxu0 0
    %779 = vmatprep.subr.bf16.mxu0 0
    %780 = vmatpush1.bf16.msra.mxu0 0
    %781 = vmatprep.subr.bf16.mxu0 0
    %782 = vmatpush1.bf16.msra.mxu0 0
    %783 = vmatprep.subr.bf16.mxu0 0
    %784 = vmatpush1.bf16.msra.mxu0 0
    %785 = vmatprep.subr.bf16.mxu0 0
    %786 = vmatpush1.bf16.msra.mxu0 0
    %787 = vmatprep.subr.bf16.mxu0 0
    %788 = vmatpush1.bf16.msra.mxu0 0
    %789 = vmatprep.subr.bf16.mxu0 0
    %790 = vmatpush1.bf16.msra.mxu0 0
    %791 = vmatprep.subr.bf16.mxu0 0
    %792 = vmatpush1.bf16.msra.mxu0 0
    %793 = vmatprep.subr.bf16.mxu0 0
    %794 = vmatpush1.bf16.msra.mxu0 0
    %795 = vmatprep.subr.bf16.mxu0 0
    %796 = vmatpush1.bf16.msra.mxu0 0
    %797 = vmatprep.subr.bf16.mxu0 0
    %798 = vmatpush1.bf16.msra.mxu0 0
    %799 = vmatprep.subr.bf16.mxu0 0
    %800 = vmatpush1.bf16.msra.mxu0 0
    %801 = vmatprep.mubr.bf16.mxu0 0
    %802 = vmatmul.mubr.bf16.gmra.mrb[0].mxu0 %v767
    %v803 = vpop.f32.mrb[0].mxu0
    %v804 = vadd.f32 %v739, %v803
    %v805 = vpop.f32.mrb[0].mxu0
    %v806 = vpop.f32.mrb[0].mxu0
    %v807 = vpop.f32.mrb[0].mxu0
    %808 = vdwg.mxu0
    %v809 = vmax.f32 %v804, 0.0
    %v810 = vpack.c.bf16 %v809, %v809
    %v811 = vld [vmem:[%s7] sm:$0xff]
    %v812 = vld [vmem:[%s7 + $0x8] sm:$0xff]
    %v813 = vld [vmem:[%s7 + $0x10] sm:$0xff]
    %v814 = vld [vmem:[%s7 + $0x18] sm:$0xf]
    %v815 = vld [vmem:[%s7 + $0x1c] sm:$0xff]
    %v816 = vld [vmem:[%s7 + $0x24] sm:$0xff]
    %v817 = vld [vmem:[%s7 + $0x2c] sm:$0xff]
    %v818 = vld [vmem:[%s7 + $0x34] sm:$0xf]
    %v819 = vld [vmem:[%s7 + $0x38] sm:$0xff]
    %v820 = vld [vmem:[%s7 + $0x40] sm:$0xff]
    %v821 = vld [vmem:[%s7 + $0x48] sm:$0xff]
    %v822 = vld [vmem:[%s7 + $0x50] sm:$0xf]
    %v823 = vld [vmem:[%s7 + $0x54] sm:$0xff]
    %v824 = vld [vmem:[%s7 + $0x5c] sm:$0xff]
    %v825 = vld [vmem:[%s7 + $0x64] sm:$0xff]
    %v826 = vld [vmem:[%s7 + $0x6c] sm:$0xf]
    %v827 = vld [vmem:[%s7 + $0x70] sm:$0xff]
    %v828 = vld [vmem:[%s7 + $0x78] sm:$0xff]
    %v829 = vld [vmem:[%s7 + $0x80] sm:$0xff]
    %v830 = vld [vmem:[%s7 + $0x88] sm:$0xf]
    %v831 = vld [vmem:[%s7 + $0x8c] sm:$0xff]
    %v832 = vld [vmem:[%s7 + $0x94] sm:$0xff]
    %v833 = vld [vmem:[%s7 + $0x9c] sm:$0xff]
    %v834 = vld [vmem:[%s7 + $0xa4] sm:$0xf]
    %v835 = vld [vmem:[%s7 + $0xa8] sm:$0xff]
    %v836 = vld [vmem:[%s7 + $0xb0] sm:$0xff]
    %v837 = vld [vmem:[%s7 + $0xb8] sm:$0xff]
    %v838 = vld [vmem:[%s7 + $0xc0] sm:$0xf]
    %v839 = vld [vmem:[%s7 + $0xc4] sm:$0xff]
    %v840 = vld [vmem:[%s7 + $0xcc] sm:$0xff]
    %v841 = vld [vmem:[%s7 + $0xd4] sm:$0xff]
    %v842 = vld [vmem:[%s7 + $0xdc] sm:$0xf]
    %v843 = vld [vmem:[%s7 + $0xe0] sm:$0xff]
    %v844 = vld [vmem:[%s7 + $0xe8] sm:$0xff]
    %v845 = vld [vmem:[%s7 + $0xf0] sm:$0xff]
    %v846 = vld [vmem:[%s7 + $0xf8] sm:$0xf]
    %v847 = vld [vmem:[%s7 + $0xfc] sm:$0xff]
    %v848 = vld [vmem:[%s7 + $0x104] sm:$0xff]
    %v849 = vld [vmem:[%s7 + $0x10c] sm:$0xff]
    %v850 = vld [vmem:[%s7 + $0x114] sm:$0xf]
    %v851 = vld [vmem:[%s7 + $0x118] sm:$0xff]
    %v852 = vld [vmem:[%s7 + $0x120] sm:$0xff]
    %v853 = vld [vmem:[%s7 + $0x128] sm:$0xff]
    %v854 = vld [vmem:[%s7 + $0x130] sm:$0xf]
    %v855 = vld [vmem:[%s7 + $0x134] sm:$0xff]
    %v856 = vld [vmem:[%s7 + $0x13c] sm:$0xff]
    %v857 = vld [vmem:[%s7 + $0x144] sm:$0xff]
    %v858 = vld [vmem:[%s7 + $0x14c] sm:$0xf]
    %v859 = vld [vmem:[%s7 + $0x150] sm:$0xff]
    %v860 = vld [vmem:[%s7 + $0x158] sm:$0xff]
    %v861 = vld [vmem:[%s7 + $0x160] sm:$0xff]
    %v862 = vld [vmem:[%s7 + $0x168] sm:$0xf]
    %v863 = vld [vmem:[%s7 + $0x16c] sm:$0xff]
    %v864 = vld [vmem:[%s7 + $0x174] sm:$0xff]
    %v865 = vld [vmem:[%s7 + $0x17c] sm:$0xff]
    %v866 = vld [vmem:[%s7 + $0x184] sm:$0xf]
    %v867 = vld [vmem:[%s7 + $0x188] sm:$0xff]
    %v868 = vld [vmem:[%s7 + $0x190] sm:$0xff]
    %v869 = vld [vmem:[%s7 + $0x198] sm:$0xff]
    %v870 = vld [vmem:[%s7 + $0x1a0] sm:$0xf]
    %v871 = vld [vmem:[%s7 + $0x1a4] sm:$0xff]
    %v872 = vld [vmem:[%s7 + $0x1ac] sm:$0xff]
    %v873 = vld [vmem:[%s7 + $0x1b4] sm:$0xff]
    %v874 = vld [vmem:[%s7 + $0x1bc] sm:$0xf]
    %v875 = vld [vmem:[%s8] sm:$0x7f]
    %v877 = vlaneseq
    %v878 = vshrl.u32 %v877, 7
    %v879 = vsub.s32 0, %v878
    %v880 = vrot.slane %v875, %v879
    %v881 = vlaneseq
    %v882 = vshrl.u32 %v881, 7
    %v883 = vsub.s32 1, %v882
    %v884 = vrot.slane %v875, %v883
    %v885 = vlaneseq
    %v886 = vshrl.u32 %v885, 7
    %v887 = vsub.s32 2, %v886
    %v888 = vrot.slane %v875, %v887
    %v889 = vlaneseq
    %v890 = vshrl.u32 %v889, 7
    %v891 = vsub.s32 3, %v890
    %v892 = vrot.slane %v875, %v891
    %v893 = vlaneseq
    %v894 = vshrl.u32 %v893, 7
    %v895 = vsub.s32 4, %v894
    %v896 = vrot.slane %v875, %v895
    %v897 = vlaneseq
    %v898 = vshrl.u32 %v897, 7
    %v899 = vsub.s32 5, %v898
    %v900 = vrot.slane %v875, %v899
    %v901 = vlaneseq
    %v902 = vshrl.u32 %v901, 7
    %v903 = vsub.s32 6, %v902
    %v904 = vrot.slane %v875, %v903
    %v976 = vunpack.c.l.b16 %v811
    %v977 = vunpack.c.h.b16 %v811
    %v978 = vunpack.c.l.b16 %v812
    %v979 = vunpack.c.h.b16 %v812
    %v980 = vunpack.c.l.b16 %v813
    %v981 = vunpack.c.h.b16 %v813
    %v982 = vunpack.c.l.b16 %v814
    %v983 = vunpack.c.l.b16 %v815
    %v984 = vunpack.c.h.b16 %v815
    %v985 = vunpack.c.l.b16 %v816
    %v986 = vunpack.c.h.b16 %v816
    %v987 = vunpack.c.l.b16 %v817
    %v988 = vunpack.c.h.b16 %v817
    %v989 = vunpack.c.l.b16 %v818
    %v990 = vunpack.c.l.b16 %v819
    %v991 = vunpack.c.h.b16 %v819
    %v992 = vunpack.c.l.b16 %v820
    %v993 = vunpack.c.h.b16 %v820
    %v994 = vunpack.c.l.b16 %v821
    %v995 = vunpack.c.h.b16 %v821
    %v996 = vunpack.c.l.b16 %v822
    %v997 = vunpack.c.l.b16 %v823
    %v998 = vunpack.c.h.b16 %v823
    %v999 = vunpack.c.l.b16 %v824
    %v1000 = vunpack.c.h.b16 %v824
    %v1001 = vunpack.c.l.b16 %v825
    %v1002 = vunpack.c.h.b16 %v825
    %v1003 = vunpack.c.l.b16 %v826
    %v1004 = vunpack.c.l.b16 %v827
    %v1005 = vunpack.c.h.b16 %v827
    %v1006 = vunpack.c.l.b16 %v828
    %v1007 = vunpack.c.h.b16 %v828
    %v1008 = vunpack.c.l.b16 %v829
    %v1009 = vunpack.c.h.b16 %v829
    %v1010 = vunpack.c.l.b16 %v830
    %v1011 = vunpack.c.l.b16 %v831
    %v1012 = vunpack.c.h.b16 %v831
    %v1013 = vunpack.c.l.b16 %v832
    %v1014 = vunpack.c.h.b16 %v832
    %v1015 = vunpack.c.l.b16 %v833
    %v1016 = vunpack.c.h.b16 %v833
    %v1017 = vunpack.c.l.b16 %v834
    %v1018 = vunpack.c.l.b16 %v835
    %v1019 = vunpack.c.h.b16 %v835
    %v1020 = vunpack.c.l.b16 %v836
    %v1021 = vunpack.c.h.b16 %v836
    %v1022 = vunpack.c.l.b16 %v837
    %v1023 = vunpack.c.h.b16 %v837
    %v1024 = vunpack.c.l.b16 %v838
    %v1025 = vunpack.c.l.b16 %v839
    %v1026 = vunpack.c.h.b16 %v839
    %v1027 = vunpack.c.l.b16 %v840
    %v1028 = vunpack.c.h.b16 %v840
    %v1029 = vunpack.c.l.b16 %v841
    %v1030 = vunpack.c.h.b16 %v841
    %v1031 = vunpack.c.l.b16 %v842
    %v1032 = vunpack.c.l.b16 %v843
    %v1033 = vunpack.c.h.b16 %v843
    %v1034 = vunpack.c.l.b16 %v844
    %v1035 = vunpack.c.h.b16 %v844
    %v1036 = vunpack.c.l.b16 %v845
    %v1037 = vunpack.c.h.b16 %v845
    %v1038 = vunpack.c.l.b16 %v846
    %v1039 = vunpack.c.l.b16 %v847
    %v1040 = vunpack.c.h.b16 %v847
    %v1041 = vunpack.c.l.b16 %v848
    %v1042 = vunpack.c.h.b16 %v848
    %v1043 = vunpack.c.l.b16 %v849
    %v1044 = vunpack.c.h.b16 %v849
    %v1045 = vunpack.c.l.b16 %v850
    %v1046 = vunpack.c.l.b16 %v851
    %v1047 = vunpack.c.h.b16 %v851
    %v1048 = vunpack.c.l.b16 %v852
    %v1049 = vunpack.c.h.b16 %v852
    %v1050 = vunpack.c.l.b16 %v853
    %v1051 = vunpack.c.h.b16 %v853
    %v1052 = vunpack.c.l.b16 %v854
    %v1053 = vunpack.c.l.b16 %v855
    %v1054 = vunpack.c.h.b16 %v855
    %v1055 = vunpack.c.l.b16 %v856
    %v1056 = vunpack.c.h.b16 %v856
    %v1057 = vunpack.c.l.b16 %v857
    %v1058 = vunpack.c.h.b16 %v857
    %v1059 = vunpack.c.l.b16 %v858
    %v1060 = vunpack.c.l.b16 %v859
    %v1061 = vunpack.c.h.b16 %v859
    %v1062 = vunpack.c.l.b16 %v860
    %v1063 = vunpack.c.h.b16 %v860
    %v1064 = vunpack.c.l.b16 %v861
    %v1065 = vunpack.c.h.b16 %v861
    %v1066 = vunpack.c.l.b16 %v862
    %v1067 = vunpack.c.l.b16 %v863
    %v1068 = vunpack.c.h.b16 %v863
    %v1069 = vunpack.c.l.b16 %v864
    %v1070 = vunpack.c.h.b16 %v864
    %v1071 = vunpack.c.l.b16 %v865
    %v1072 = vunpack.c.h.b16 %v865
    %v1073 = vunpack.c.l.b16 %v866
    %v1074 = vunpack.c.l.b16 %v867
    %v1075 = vunpack.c.h.b16 %v867
    %v1076 = vunpack.c.l.b16 %v868
    %v1077 = vunpack.c.h.b16 %v868
    %v1078 = vunpack.c.l.b16 %v869
    %v1079 = vunpack.c.h.b16 %v869
    %v1080 = vunpack.c.l.b16 %v870
    %v1081 = vunpack.c.l.b16 %v871
    %v1082 = vunpack.c.h.b16 %v871
    %v1083 = vunpack.c.l.b16 %v872
    %v1084 = vunpack.c.h.b16 %v872
    %v1085 = vunpack.c.l.b16 %v873
    %v1086 = vunpack.c.h.b16 %v873
    %v1087 = vunpack.c.l.b16 %v874
    %v1088 = vpack.c.b16 %v983, %v976
    %v1089 = vpack.c.b16 %v984, %v977
    %v1090 = vpack.c.b16 %v985, %v978
    %v1091 = vpack.c.b16 %v986, %v979
    %v1092 = vpack.c.b16 %v987, %v980
    %v1093 = vpack.c.b16 %v988, %v981
    %v1094 = vpack.c.b16 %v989, %v982
    %v1095 = vpack.c.b16 %v997, %v990
    %v1096 = vpack.c.b16 %v998, %v991
    %v1097 = vpack.c.b16 %v999, %v992
    %v1098 = vpack.c.b16 %v1000, %v993
    %v1099 = vpack.c.b16 %v1001, %v994
    %v1100 = vpack.c.b16 %v1002, %v995
    %v1101 = vpack.c.b16 %v1003, %v996
    %v1102 = vpack.c.b16 %v1011, %v1004
    %v1103 = vpack.c.b16 %v1012, %v1005
    %v1104 = vpack.c.b16 %v1013, %v1006
    %v1105 = vpack.c.b16 %v1014, %v1007
    %v1106 = vpack.c.b16 %v1015, %v1008
    %v1107 = vpack.c.b16 %v1016, %v1009
    %v1108 = vpack.c.b16 %v1017, %v1010
    %v1109 = vpack.c.b16 %v1025, %v1018
    %v1110 = vpack.c.b16 %v1026, %v1019
    %v1111 = vpack.c.b16 %v1027, %v1020
    %v1112 = vpack.c.b16 %v1028, %v1021
    %v1113 = vpack.c.b16 %v1029, %v1022
    %v1114 = vpack.c.b16 %v1030, %v1023
    %v1115 = vpack.c.b16 %v1031, %v1024
    %v1116 = vpack.c.b16 %v1039, %v1032
    %v1117 = vpack.c.b16 %v1040, %v1033
    %v1118 = vpack.c.b16 %v1041, %v1034
    %v1119 = vpack.c.b16 %v1042, %v1035
    %v1120 = vpack.c.b16 %v1043, %v1036
    %v1121 = vpack.c.b16 %v1044, %v1037
    %v1122 = vpack.c.b16 %v1045, %v1038
    %v1123 = vpack.c.b16 %v1053, %v1046
    %v1124 = vpack.c.b16 %v1054, %v1047
    %v1125 = vpack.c.b16 %v1055, %v1048
    %v1126 = vpack.c.b16 %v1056, %v1049
    %v1127 = vpack.c.b16 %v1057, %v1050
    %v1128 = vpack.c.b16 %v1058, %v1051
    %v1129 = vpack.c.b16 %v1059, %v1052
    %v1130 = vpack.c.b16 %v1067, %v1060
    %v1131 = vpack.c.b16 %v1068, %v1061
    %v1132 = vpack.c.b16 %v1069, %v1062
    %v1133 = vpack.c.b16 %v1070, %v1063
    %v1134 = vpack.c.b16 %v1071, %v1064
    %v1135 = vpack.c.b16 %v1072, %v1065
    %v1136 = vpack.c.b16 %v1073, %v1066
    %v1137 = vpack.c.b16 %v1081, %v1074
    %v1138 = vpack.c.b16 %v1082, %v1075
    %v1139 = vpack.c.b16 %v1083, %v1076
    %v1140 = vpack.c.b16 %v1084, %v1077
    %v1141 = vpack.c.b16 %v1085, %v1078
    %v1142 = vpack.c.b16 %v1086, %v1079
    %v1143 = vpack.c.b16 %v1087, %v1080
    %1200 = vmatprep.subr.bf16.mxu0 %v1089
    %1201 = vmatpush1.bf16.msra.mxu0 %v1088
    %1202 = vmatprep.subr.bf16.mxu0 %v1096
    %1203 = vmatpush1.bf16.msra.mxu0 %v1095
    %1204 = vmatprep.subr.bf16.mxu0 %v1103
    %1205 = vmatpush1.bf16.msra.mxu0 %v1102
    %1206 = vmatprep.subr.bf16.mxu0 %v1110
    %1207 = vmatpush1.bf16.msra.mxu0 %v1109
    %1208 = vmatprep.subr.bf16.mxu0 %v1117
    %1209 = vmatpush1.bf16.msra.mxu0 %v1116
    %1210 = vmatprep.subr.bf16.mxu0 %v1124
    %1211 = vmatpush1.bf16.msra.mxu0 %v1123
    %1212 = vmatprep.subr.bf16.mxu0 %v1131
    %1213 = vmatpush1.bf16.msra.mxu0 %v1130
    %1214 = vmatprep.subr.bf16.mxu0 %v1138
    %1215 = vmatpush1.bf16.msra.mxu0 %v1137
    %1216 = vmatprep.subr.bf16.mxu0 0
    %1217 = vmatpush1.bf16.msra.mxu0 0
    %1218 = vmatprep.subr.bf16.mxu0 0
    %1219 = vmatpush1.bf16.msra.mxu0 0
    %1220 = vmatprep.subr.bf16.mxu0 0
    %1221 = vmatpush1.bf16.msra.mxu0 0
    %1222 = vmatprep.subr.bf16.mxu0 0
    %1223 = vmatpush1.bf16.msra.mxu0 0
    %1224 = vmatprep.subr.bf16.mxu0 0
    %1225 = vmatpush1.bf16.msra.mxu0 0
    %1226 = vmatprep.subr.bf16.mxu0 0
    %1227 = vmatpush1.bf16.msra.mxu0 0
    %1228 = vmatprep.subr.bf16.mxu0 0
    %1229 = vmatpush1.bf16.msra.mxu0 0
    %1230 = vmatprep.subr.bf16.mxu0 0
    %1231 = vmatpush1.bf16.msra.mxu0 0
    %1232 = vmatprep.mubr.bf16.mxu0 0
    %1233 = vmatmul.mubr.bf16.gmra.mrb[0].mxu0 %v810
    %v1234 = vpop.f32.mrb[0].mxu0
    %v1235 = vadd.f32 %v880, %v1234
    %v1236 = vpop.f32.mrb[0].mxu0
    %v1237 = vadd.f32 %v884, %v1236
    %v1238 = vpop.f32.mrb[0].mxu0
    %v1239 = vpop.f32.mrb[0].mxu0
    %1240 = vdwg.mxu0
    %1241 = vmatprep.subr.bf16.mxu0 %v1091
    %1242 = vmatpush1.bf16.msra.mxu0 %v1090
    %1243 = vmatprep.subr.bf16.mxu0 %v1098
    %1244 = vmatpush1.bf16.msra.mxu0 %v1097
    %1245 = vmatprep.subr.bf16.mxu0 %v1105
    %1246 = vmatpush1.bf16.msra.mxu0 %v1104
    %1247 = vmatprep.subr.bf16.mxu0 %v1112
    %1248 = vmatpush1.bf16.msra.mxu0 %v1111
    %1249 = vmatprep.subr.bf16.mxu0 %v1119
    %1250 = vmatpush1.bf16.msra.mxu0 %v1118
    %1251 = vmatprep.subr.bf16.mxu0 %v1126
    %1252 = vmatpush1.bf16.msra.mxu0 %v1125
    %1253 = vmatprep.subr.bf16.mxu0 %v1133
    %1254 = vmatpush1.bf16.msra.mxu0 %v1132
    %1255 = vmatprep.subr.bf16.mxu0 %v1140
    %1256 = vmatpush1.bf16.msra.mxu0 %v1139
    %1257 = vmatprep.subr.bf16.mxu0 0
    %1258 = vmatpush1.bf16.msra.mxu0 0
    %1259 = vmatprep.subr.bf16.mxu0 0
    %1260 = vmatpush1.bf16.msra.mxu0 0
    %1261 = vmatprep.subr.bf16.mxu0 0
    %1262 = vmatpush1.bf16.msra.mxu0 0
    %1263 = vmatprep.subr.bf16.mxu0 0
    %1264 = vmatpush1.bf16.msra.mxu0 0
    %1265 = vmatprep.subr.bf16.mxu0 0
    %1266 = vmatpush1.bf16.msra.mxu0 0
    %1267 = vmatprep.subr.bf16.mxu0 0
    %1268 = vmatpush1.bf16.msra.mxu0 0
    %1269 = vmatprep.subr.bf16.mxu0 0
    %1270 = vmatpush1.bf16.msra.mxu0 0
    %1271 = vmatprep.subr.bf16.mxu0 0
    %1272 = vmatpush1.bf16.msra.mxu0 0
    %1273 = vmatprep.mubr.bf16.mxu0 0
    %1274 = vmatmul.mubr.bf16.gmra.mrb[0].mxu0 %v810
    %v1275 = vpop.f32.mrb[0].mxu0
    %v1276 = vadd.f32 %v888, %v1275
    %v1277 = vpop.f32.mrb[0].mxu0
    %v1278 = vadd.f32 %v892, %v1277
    %v1279 = vpop.f32.mrb[0].mxu0
    %v1280 = vpop.f32.mrb[0].mxu0
    %1281 = vdwg.mxu0
    %1282 = vmatprep.subr.bf16.mxu0 %v1093
    %1283 = vmatpush1.bf16.msra.mxu0 %v1092
    %1284 = vmatprep.subr.bf16.mxu0 %v1100
    %1285 = vmatpush1.bf16.msra.mxu0 %v1099
    %1286 = vmatprep.subr.bf16.mxu0 %v1107
    %1287 = vmatpush1.bf16.msra.mxu0 %v1106
    %1288 = vmatprep.subr.bf16.mxu0 %v1114
    %1289 = vmatpush1.bf16.msra.mxu0 %v1113
    %1290 = vmatprep.subr.bf16.mxu0 %v1121
    %1291 = vmatpush1.bf16.msra.mxu0 %v1120
    %1292 = vmatprep.subr.bf16.mxu0 %v1128
    %1293 = vmatpush1.bf16.msra.mxu0 %v1127
    %1294 = vmatprep.subr.bf16.mxu0 %v1135
    %1295 = vmatpush1.bf16.msra.mxu0 %v1134
    %1296 = vmatprep.subr.bf16.mxu0 %v1142
    %1297 = vmatpush1.bf16.msra.mxu0 %v1141
    %1298 = vmatprep.subr.bf16.mxu0 0
    %1299 = vmatpush1.bf16.msra.mxu0 0
    %1300 = vmatprep.subr.bf16.mxu0 0
    %1301 = vmatpush1.bf16.msra.mxu0 0
    %1302 = vmatprep.subr.bf16.mxu0 0
    %1303 = vmatpush1.bf16.msra.mxu0 0
    %1304 = vmatprep.subr.bf16.mxu0 0
    %1305 = vmatpush1.bf16.msra.mxu0 0
    %1306 = vmatprep.subr.bf16.mxu0 0
    %1307 = vmatpush1.bf16.msra.mxu0 0
    %1308 = vmatprep.subr.bf16.mxu0 0
    %1309 = vmatpush1.bf16.msra.mxu0 0
    %1310 = vmatprep.subr.bf16.mxu0 0
    %1311 = vmatpush1.bf16.msra.mxu0 0
    %1312 = vmatprep.subr.bf16.mxu0 0
    %1313 = vmatpush1.bf16.msra.mxu0 0
    %1314 = vmatprep.mubr.bf16.mxu0 0
    %1315 = vmatmul.mubr.bf16.gmra.mrb[0].mxu0 %v810
    %v1316 = vpop.f32.mrb[0].mxu0
    %v1317 = vadd.f32 %v896, %v1316
    %v1318 = vpop.f32.mrb[0].mxu0
    %v1319 = vadd.f32 %v900, %v1318
    %v1320 = vpop.f32.mrb[0].mxu0
    %v1321 = vpop.f32.mrb[0].mxu0
    %1322 = vdwg.mxu0
    %1323 = vmatprep.subr.bf16.mxu0 0
    %1324 = vmatpush1.bf16.msra.mxu0 %v1094
    %1325 = vmatprep.subr.bf16.mxu0 0
    %1326 = vmatpush1.bf16.msra.mxu0 %v1101
    %1327 = vmatprep.subr.bf16.mxu0 0
    %1328 = vmatpush1.bf16.msra.mxu0 %v1108
    %1329 = vmatprep.subr.bf16.mxu0 0
    %1330 = vmatpush1.bf16.msra.mxu0 %v1115
    %1331 = vmatprep.subr.bf16.mxu0 0
    %1332 = vmatpush1.bf16.msra.mxu0 %v1122
    %1333 = vmatprep.subr.bf16.mxu0 0
    %1334 = vmatpush1.bf16.msra.mxu0 %v1129
    %1335 = vmatprep.subr.bf16.mxu0 0
    %1336 = vmatpush1.bf16.msra.mxu0 %v1136
    %1337 = vmatprep.subr.bf16.mxu0 0
    %1338 = vmatpush1.bf16.msra.mxu0 %v1143
    %1339 = vmatprep.subr.bf16.mxu0 0
    %1340 = vmatpush1.bf16.msra.mxu0 0
    %1341 = vmatprep.subr.bf16.mxu0 0
    %1342 = vmatpush1.bf16.msra.mxu0 0
    %1343 = vmatprep.subr.bf16.mxu0 0
    %1344 = vmatpush1.bf16.msra.mxu0 0
    %1345 = vmatprep.subr.bf16.mxu0 0
    %1346 = vmatpush1.bf16.msra.mxu0 0
    %1347 = vmatprep.subr.bf16.mxu0 0
    %1348 = vmatpush1.bf16.msra.mxu0 0
    %1349 = vmatprep.subr.bf16.mxu0 0
    %1350 = vmatpush1.bf16.msra.mxu0 0
    %1351 = vmatprep.subr.bf16.mxu0 0
    %1352 = vmatpush1.bf16.msra.mxu0 0
    %1353 = vmatprep.subr.bf16.mxu0 0
    %1354 = vmatpush1.bf16.msra.mxu0 0
    %1355 = vmatprep.mubr.bf16.mxu0 0
    %1356 = vmatmul.mubr.bf16.gmra.mrb[0].mxu0 %v810
    %v1357 = vpop.f32.mrb[0].mxu0
    %v1358 = vadd.f32 %v904, %v1357
    %v1359 = vpop.f32.mrb[0].mxu0
    %v1360 = vpop.f32.mrb[0].mxu0
    %v1361 = vpop.f32.mrb[0].mxu0
    %1362 = vdwg.mxu0
    %v1363 = vxor.u32 %v1235, 2147483648
    %v1364 = vxor.u32 %v1237, 2147483648
    %v1365 = vxor.u32 %v1276, 2147483648
    %v1366 = vxor.u32 %v1278, 2147483648
    %v1367 = vxor.u32 %v1317, 2147483648
    %v1368 = vxor.u32 %v1319, 2147483648
    %v1369 = vxor.u32 %v1358, 2147483648
    %v1370 = vmul.f32 %v1363, 1.442695
    %v1371 = vpow.pop %v1370
    %v1372 = vmul.f32 %v1364, 1.442695
    %v1373 = vpow.pop %v1372
    %v1374 = vmul.f32 %v1365, 1.442695
    %v1375 = vpow.pop %v1374
    %v1376 = vmul.f32 %v1366, 1.442695
    %v1377 = vpow.pop %v1376
    %v1378 = vmul.f32 %v1367, 1.442695
    %v1379 = vpow.pop %v1378
    %v1380 = vmul.f32 %v1368, 1.442695
    %v1381 = vpow.pop %v1380
    %v1382 = vmul.f32 %v1369, 1.442695
    %v1383 = vpow.pop %v1382
    %v1384 = vadd.f32 %v1371, 1.0
    %v1385 = vadd.f32 %v1373, 1.0
    %v1386 = vadd.f32 %v1375, 1.0
    %v1387 = vadd.f32 %v1377, 1.0
    %v1388 = vadd.f32 %v1379, 1.0
    %v1389 = vadd.f32 %v1381, 1.0
    %v1390 = vadd.f32 %v1383, 1.0
    %v1391 = vrcp.pop %v1384
    %v1392 = vmul.f32 1.0, %v1391
    %v1393 = vrcp.pop %v1385
    %v1394 = vmul.f32 1.0, %v1393
    %v1395 = vrcp.pop %v1386
    %v1396 = vmul.f32 1.0, %v1395
    %v1397 = vrcp.pop %v1387
    %v1398 = vmul.f32 1.0, %v1397
    %v1399 = vrcp.pop %v1388
    %v1400 = vmul.f32 1.0, %v1399
    %v1401 = vrcp.pop %v1389
    %v1402 = vmul.f32 1.0, %v1401
    %v1403 = vrcp.pop %v1390
    %v1404 = vmul.f32 1.0, %v1403
    %1405 = vst [vmem:[#allocation2] sm:$0xff] %v1392
    %1406 = vst [vmem:[#allocation2 + $0x8] sm:$0xff] %v1394
    %1407 = vst [vmem:[#allocation2 + $0x10] sm:$0xff] %v1396
    %1408 = vst [vmem:[#allocation2 + $0x18] sm:$0xff] %v1398
    %1409 = vst [vmem:[#allocation2 + $0x20] sm:$0xff] %v1400
    %1410 = vst [vmem:[#allocation2 + $0x28] sm:$0xff] %v1402
    %1411 = vst.msk [vmem:[#allocation2 + $0x30] sm:$0xff] %vm447, %v1404
    // Predicated region
    $region38: #{autoencoder_forward.1} parent=1 // pred_check
      _
    $region39: #{autoencoder_forward.1} parent=1 // pred_check_branch
      %1413 = sbr.rel (0) target = $region41
    $region40: #{autoencoder_forward.1} parent=1 // pred_region
      %s1415 = ssub.s32 896, 896
      %1416 = vsyncadd [#allocation3], %s1415
      %s1418 = sshll.u32 [#allocation2], 4
      %s1419 = int_to_ptr.vmem [resolvable:$true] %s1418
      %1421 = dma.vmem_to_hbm [thread:$0]  %s1419, 896, %s9, [#allocation3]
    $region41: #{autoencoder_forward.1} parent=1 // pred_fallthru
      _
    // Predicated region
    $region42: #{autoencoder_forward.1} parent=1 // pred_check
      _
    $region43: #{autoencoder_forward.1} parent=1 // pred_check_branch
      %1423 = sbr.rel (0) target = $region45
    $region44: #{autoencoder_forward.1} parent=1 // pred_region
      %1424 = dma.done [#allocation3], 896
    $region45: #{autoencoder_forward.1} parent=1 // pred_fallthru
      _
    %1425 = vsyncpa [#allocation3], 1

</llo_original>
